<compile_context>
chip_gen: v7x
topology: tpu7x:2x2x1
jax: 0.10.0
libtpu: 0.0.40
codegen_flags: <defaults>
</compile_context>

<pallas_src>
import functools

import jax
import jax.numpy as jnp
from jax.experimental import pallas as pl
from jax.experimental.pallas import tpu as pltpu

# ----- constants mirroring the PyTorch module's config -----------------------
NUM_CODONS = 64        # len(CODON_MAP_DNA)
NUM_TISSUES = 8        # len(TISSUES)
DIM_EMB_TISSUE = 16    # config.dim_embedding_tissue
HIDDEN = 32            # config.hidden_size
EMB_MAX_NORM = 1.0     # config.embedding_max_norm
BINARY_CLASS = True    # config.binary_class -> append Sigmoid

_LANES = 128           # one vreg lane row = two packed 64-wide codon one-hots
_CHUNK_S = 32          # sequence positions folded per fused inner-loop step
_BLOCK_S_MAX = 512     # seq positions per grid block (reduction axis)
_BLOCK_B_MAX = 128     # batch rows per grid block


def _round_up(x, m):
    return (x + m - 1) // m * m


def _pick_count_dtype():
    """bf16 counting on bf16-native VALUs (v6e / v7x), f32 elsewhere (v5e...)."""
    try:
        kind = jax.devices()[0].device_kind.lower()
    except Exception:
        return jnp.float32
    if ("v6" in kind) or ("v7" in kind) or ("7x" in kind):
        return jnp.bfloat16
    return jnp.float32


def _baseline_kernel(tid_ref, tok_ref, w1t_ref, w1f_ref, b1_ref, w2_ref,
                     b2_ref, o_ref, cnt_ref, *, count_dtype):
    j = pl.program_id(1)
    block_b, block_s = tok_ref.shape
    num_chunks = block_s // _CHUNK_S
    half = _CHUNK_S // 2

    @pl.when(j == 0)
    def _init():
        cnt_ref[...] = jnp.zeros_like(cnt_ref)

    # Lane-packed codon-id planes: lanes 0..63 hold ids 1..64 ("lo" plane),
    # lanes 64..127 hold ids 1..64 again ("hi" plane).  The inactive half of
    # each plane is a -1 sentinel that never matches a token (tokens are 0..64,
    # pad = 0 matches nothing).
    lane = jax.lax.broadcasted_iota(jnp.int32, (1, 1, _LANES), 2)
    c_lo = jnp.where(lane < NUM_CODONS, lane + 1, -1).astype(count_dtype)
    c_hi = jnp.where(lane >= NUM_CODONS, lane - (NUM_CODONS - 1), -1).astype(count_dtype)

    # Fused compare + reduce over 32-position chunks: the per-chunk one-hot is
    # only (block_b, 16, 128) and is reduced immediately, so the full
    # (block_b, block_s, 64) tensor is never materialized.  Positions s and
    # s + half of the chunk share one 128-lane row (full lane utilization).
    acc = jnp.zeros((block_b, _LANES), jnp.float32)
    for c in range(num_chunks):                               # static trip count
        s0 = c * _CHUNK_S
        chunk = tok_ref[:, s0:s0 + _CHUNK_S].astype(jnp.int32).astype(count_dtype)
        first = chunk[:, :half, None]                         # (block_b, 16, 1)
        second = chunk[:, half:, None]                        # (block_b, 16, 1)
        hit = (first == c_lo) | (second == c_hi)              # (block_b, 16, 128)
        partial = jnp.sum(hit.astype(count_dtype), axis=1)    # <= 16 -> exact
        acc = acc + partial.astype(jnp.float32)
    cnt_ref[...] += acc

    # --- fused head: only on the last seq block -------------------------------
    @pl.when(j == pl.num_programs(1) - 1)
    def _head():
        c128 = cnt_ref[...]
        counts = c128[:, :NUM_CODONS] + c128[:, NUM_CODONS:]       # (block_b, 64)
        total = jnp.sum(counts, axis=1, keepdims=True)             # pads excluded
        inv_total = 1.0 / jnp.maximum(total, 1.0)                  # exact divide

        # tissue embedding: renorm already folded into w1t in the wrapper,
        # so the gather is a one-hot matmul against the folded (8, H) weight.
        tid = tid_ref[...]                                         # (block_b, 1)
        t_iota = jax.lax.broadcasted_iota(jnp.int32, (1, NUM_TISSUES), 1)
        t_onehot = (tid == t_iota).astype(jnp.float32)             # (block_b, 8)

        h = (jnp.dot(t_onehot, w1t_ref[...], preferred_element_type=jnp.float32)
             + jnp.dot(counts, w1f_ref[...], preferred_element_type=jnp.float32)
             * inv_total
             + b1_ref[...])
        h = jnp.maximum(h, 0.0)                                    # ReLU
        y = jnp.dot(h, w2_ref[...], preferred_element_type=jnp.float32) + b2_ref[...]
        if BINARY_CLASS:
            y = jax.nn.sigmoid(y)
        o_ref[...] = y                                             # (block_b, 1)


def model_baseline_forward(rna_data, tissue_id, params):
    emb = params["emb"].astype(jnp.float32)
    w1 = params["w1"].astype(jnp.float32)
    b1 = params["b1"].astype(jnp.float32)
    w2 = params["w2"].astype(jnp.float32)
    b2 = params["b2"].astype(jnp.float32)
    hidden = w1.shape[1]

    # ---- hoisted parameter-only math (review item) ----------------------------
    # nn.Embedding(max_norm=...) renorm, pre-folded into the tissue rows of the
    # first Linear: tissue_w1 = renorm(emb) @ w1[:DIM_EMB_TISSUE]  -> (8, H).
    nrm = jnp.sqrt(jnp.sum(emb * emb, axis=1, keepdims=True))
    scl = jnp.where(nrm > EMB_MAX_NORM, EMB_MAX_NORM / (nrm + 1e-7), 1.0)
    w1_tissue = jnp.dot(emb * scl, w1[:DIM_EMB_TISSUE])            # (8, H)
    w1_freq = w1[DIM_EMB_TISSUE:]                                  # (64, H)

    B, S = rna_data.shape

    # ---- batch blocking: >=2 "parallel" blocks when B > 32 (v7x megacore) -----
    if B <= 32:
        block_b = _round_up(B, 8)                  # single batch block
    else:
        block_b = min(_BLOCK_B_MAX, _round_up((B + 1) // 2, 32))
    b_pad = _round_up(B, block_b)

    # ---- seq blocking: fused counting keeps VMEM tiny -> big blocks are safe --
    if S <= _BLOCK_S_MAX:
        block_s = _round_up(S, _CHUNK_S)           # single (full) seq block
        s_pad = block_s
    else:
        block_s = _BLOCK_S_MAX
        s_pad = _round_up(S, block_s)

    tok = rna_data.astype(jnp.int8)                # codon ids 1..64, pad = 0
    if (b_pad != B) or (s_pad != S):
        tok = jnp.pad(tok, ((0, b_pad - B), (0, s_pad - S)))
    tid = tissue_id.astype(jnp.int32).reshape(B, 1)
    if b_pad != B:
        tid = jnp.pad(tid, ((0, b_pad - B), (0, 0)))

    grid = (b_pad // block_b, s_pad // block_s)
    kernel = functools.partial(_baseline_kernel, count_dtype=_pick_count_dtype())

    out = pl.pallas_call(
        kernel,
        out_shape=jax.ShapeDtypeStruct((b_pad, 1), jnp.float32),
        grid_spec=pltpu.PrefetchScalarGridSpec(
            num_scalar_prefetch=0,
            grid=grid,
            in_specs=[
                pl.BlockSpec((block_b, 1), lambda i, j: (i, 0)),           # tissue ids
                pl.BlockSpec((block_b, block_s), lambda i, j: (i, j)),     # tokens (int8)
                pl.BlockSpec((NUM_TISSUES, hidden), lambda i, j: (0, 0)),  # folded w1 (tissue)
                pl.BlockSpec((NUM_CODONS, hidden), lambda i, j: (0, 0)),   # w1 (freq)
                pl.BlockSpec((1, hidden), lambda i, j: (0, 0)),            # b1
                pl.BlockSpec((hidden, 1), lambda i, j: (0, 0)),            # w2
                pl.BlockSpec((1, 1), lambda i, j: (0, 0)),                 # b2
            ],
            out_specs=pl.BlockSpec((block_b, 1), lambda i, j: (i, 0)),
            scratch_shapes=[pltpu.VMEM((block_b, _LANES), jnp.float32)],
        ),
        compiler_params=pltpu.CompilerParams(
            dimension_semantics=("parallel", "arbitrary"),
            vmem_limit_bytes=32 * 1024 * 1024,
        ),
    )(tid, tok, w1_tissue, w1_freq, b1.reshape(1, hidden),
      w2.reshape(hidden, 1), b2.reshape(1, 1))

    return out[:B]


if __name__ == "__main__":
    key = jax.random.PRNGKey(0)
    (k_emb, k_w1, k_b1, k_w2, k_b2,
     k_tok, k_tis, k_tok2, k_tis2) = jax.random.split(key, 9)

    params = dict(
        emb=jax.random.normal(k_emb, (NUM_TISSUES, DIM_EMB_TISSUE), jnp.float32),
        w1=0.1 * jax.random.normal(
            k_w1, (DIM_EMB_TISSUE + NUM_CODONS, HIDDEN), jnp.float32),
        b1=0.01 * jax.random.normal(k_b1, (HIDDEN,), jnp.float32),
        w2=0.1 * jax.random.normal(k_w2, (HIDDEN, 1), jnp.float32),
        b2=0.01 * jax.random.normal(k_b2, (1,), jnp.float32),
    )

    def reference(rna_data, tissue_id, params):
        b = rna_data.shape[0]
        counts = jnp.stack(
            [jnp.bincount(rna_data[i], length=NUM_CODONS + 1)[1:] for i in range(b)]
        ).astype(jnp.float32)
        freq = counts / counts.sum(axis=1, keepdims=True)
        nrm = jnp.linalg.norm(params["emb"], axis=1, keepdims=True)
        scl = jnp.where(nrm > EMB_MAX_NORM, EMB_MAX_NORM / (nrm + 1e-7), 1.0)
        emb = (params["emb"] * scl)[tissue_id]
        x = jnp.concatenate([emb, freq], axis=1)
        hh = jnp.maximum(x @ params["w1"] + params["b1"], 0.0)
        y = hh @ params["w2"] + params["b2"].reshape(1, 1)
        return jax.nn.sigmoid(y) if BINARY_CLASS else y

    fwd = jax.jit(model_baseline_forward)

    # --- case 1: toy shapes (single grid step, seq padded to the 32-chunk) ----
    B1, S1 = 8, 16
    rna1 = jax.random.randint(k_tok, (B1, S1), 1, NUM_CODONS + 1, jnp.int32)
    tis1 = jax.random.randint(k_tis, (B1,), 0, NUM_TISSUES, jnp.int32)
    y1 = jax.block_until_ready(fwd(rna1, tis1, params))
    assert y1.shape == (B1, 1)
    y1_ref = reference(rna1, tis1, params)
    assert jnp.allclose(y1, y1_ref, atol=2e-3, rtol=2e-3), (y1, y1_ref)

    # --- case 2: exercises the seq-reduction grid (2 blocks), 2 batch blocks,
    #             batch/seq padding and pad tokens (id 0) ----------------------
    B2, S2 = 40, 700
    rna2 = jax.random.randint(k_tok2, (B2, S2), 1, NUM_CODONS + 1, jnp.int32)
    rna2 = rna2.at[:, 640:].set(0)            # trailing padding codons (id 0)
    tis2 = jax.random.randint(k_tis2, (B2,), 0, NUM_TISSUES, jnp.int32)
    y2 = jax.block_until_ready(fwd(rna2, tis2, params))
    assert y2.shape == (B2, 1)
    y2_ref = reference(rna2, tis2, params)
    assert jnp.allclose(y2, y2_ref, atol=2e-3, rtol=2e-3), (y2, y2_ref)

    print("KERNEL_OK")
</pallas_src>

<mosaic_0001>
module attributes {stable_mosaic.version = 11 : i64} {
  func.func @_baseline_kernel(%arg0: i32, %arg1: i32, %arg2: memref<8x1xi32, #tpu.memory_space<vmem>>, %arg3: memref<8x32xi8, #tpu.memory_space<vmem>>, %arg4: memref<8x32xf32, #tpu.memory_space<vmem>>, %arg5: memref<64x32xf32, #tpu.memory_space<vmem>>, %arg6: memref<1x32xf32, #tpu.memory_space<vmem>>, %arg7: memref<32x1xf32, #tpu.memory_space<vmem>>, %arg8: memref<1x1xf32, #tpu.memory_space<vmem>>, %arg9: memref<8x1xf32, #tpu.memory_space<vmem>>, %arg10: memref<8x128xf32, #tpu.memory_space<vmem>>) attributes {dimension_semantics = [#tpu.dimension_semantics<parallel>, #tpu.dimension_semantics<arbitrary>], iteration_bounds = array<i64: 1, 1>, scalar_prefetch = 0 : i64, scratch_operands = 1 : i64, tpu.core_type = #tpu.core_type<tc>, window_params = [{transform_indices = @transform_0, window_bounds = array<i64: 8, 1>}, {transform_indices = @transform_1, window_bounds = array<i64: 8, 32>}, {pipeline_mode = #tpu.pipeline_mode<synchronous>, transform_indices = @transform_2, window_bounds = array<i64: 8, 32>}, {pipeline_mode = #tpu.pipeline_mode<synchronous>, transform_indices = @transform_3, window_bounds = array<i64: 64, 32>}, {pipeline_mode = #tpu.pipeline_mode<synchronous>, transform_indices = @transform_4, window_bounds = array<i64: 1, 32>}, {pipeline_mode = #tpu.pipeline_mode<synchronous>, transform_indices = @transform_5, window_bounds = array<i64: 32, 1>}, {pipeline_mode = #tpu.pipeline_mode<synchronous>, transform_indices = @transform_6, window_bounds = array<i64: 1, 1>}, {transform_indices = @transform_7, window_bounds = array<i64: 8, 1>}]} {
    %c0_i32 = arith.constant 0 : i32
    %0 = arith.cmpi eq, %arg1, %c0_i32 : i32
    %1 = arith.extui %0 : i1 to i32
    %c0_i32_0 = arith.constant 0 : i32
    %2 = arith.cmpi ne, %1, %c0_i32_0 : i32
    scf.if %2 {
      %cst_11 = arith.constant 0.000000e+00 : f32
      %43 = vector.broadcast %cst_11 : f32 to vector<8x128xf32>
      %c0_12 = arith.constant 0 : index
      %c0_13 = arith.constant 0 : index
      %44 = vector.load %arg10[%c0_12, %c0_13] : memref<8x128xf32, #tpu.memory_space<vmem>>, vector<8x128xf32>
      tpu.vector_store %arg10[%c0_12, %c0_13], %43 {strides = array<i32>} : memref<8x128xf32, #tpu.memory_space<vmem>>, vector<8x128xf32>,
    } else {
    }
    %3 = tpu.iota {dimensions = array<i32: 2>} : vector<1x1x128xi32>
    %c64_i32 = arith.constant 64 : i32
    %4 = vector.broadcast %c64_i32 : i32 to vector<1x1x128xi32>
    %5 = arith.cmpi slt, %3, %4 : vector<1x1x128xi32>
    %c1_i32 = arith.constant 1 : i32
    %6 = vector.broadcast %c1_i32 : i32 to vector<1x1x128xi32>
    %7 = arith.addi %3, %6 : vector<1x1x128xi32>
    %c-1_i32 = arith.constant -1 : i32
    %8 = vector.broadcast %c-1_i32 : i32 to vector<1x1x128xi32>
    %9 = arith.select %5, %7, %8 : vector<1x1x128xi1>, vector<1x1x128xi32>
    %10 = arith.sitofp %9 : vector<1x1x128xi32> to vector<1x1x128xf32>
    %c64_i32_1 = arith.constant 64 : i32
    %11 = vector.broadcast %c64_i32_1 : i32 to vector<1x1x128xi32>
    %12 = arith.cmpi sge, %3, %11 : vector<1x1x128xi32>
    %c63_i32 = arith.constant 63 : i32
    %13 = vector.broadcast %c63_i32 : i32 to vector<1x1x128xi32>
    %14 = arith.subi %3, %13 : vector<1x1x128xi32>
    %c-1_i32_2 = arith.constant -1 : i32
    %15 = vector.broadcast %c-1_i32_2 : i32 to vector<1x1x128xi32>
    %16 = arith.select %12, %14, %15 : vector<1x1x128xi1>, vector<1x1x128xi32>
    %17 = arith.sitofp %16 : vector<1x1x128xi32> to vector<1x1x128xf32>
    %cst = arith.constant 0.000000e+00 : f32
    %18 = vector.broadcast %cst : f32 to vector<8x128xf32>
    %c0 = arith.constant 0 : index
    %c0_3 = arith.constant 0 : index
    %19 = vector.load %arg3[%c0, %c0_3] : memref<8x32xi8, #tpu.memory_space<vmem>>, vector<8x32xi8>
    %20 = arith.extsi %19 : vector<8x32xi8> to vector<8x32xi32>
    %21 = arith.sitofp %20 : vector<8x32xi32> to vector<8x32xf32>
    %22 = vector.extract_strided_slice %21 {offsets = [0, 0], sizes = [8, 16], strides = [1, 1]} : vector<8x32xf32> to vector<8x16xf32>
    %23 = vector.shape_cast %22 : vector<8x16xf32> to vector<8x16x1xf32>
    %24 = vector.extract_strided_slice %21 {offsets = [0, 16], sizes = [8, 16], strides = [1, 1]} : vector<8x32xf32> to vector<8x16xf32>
    %25 = vector.shape_cast %24 : vector<8x16xf32> to vector<8x16x1xf32>
    %26 = vector.broadcast %23 : vector<8x16x1xf32> to vector<8x16x128xf32>
    %27 = vector.broadcast %10 : vector<1x1x128xf32> to vector<8x16x128xf32>
    %28 = arith.cmpf oeq, %26, %27 : vector<8x16x128xf32>
    %29 = vector.broadcast %25 : vector<8x16x1xf32> to vector<8x16x128xf32>
    %30 = vector.broadcast %17 : vector<1x1x128xf32> to vector<8x16x128xf32>
    %31 = arith.cmpf oeq, %29, %30 : vector<8x16x128xf32>
    %32 = arith.ori %28, %31 : vector<8x16x128xi1>
    %33 = arith.extui %32 : vector<8x16x128xi1> to vector<8x16x128xi32>
    %34 = arith.sitofp %33 : vector<8x16x128xi32> to vector<8x16x128xf32>
    %cst_4 = arith.constant dense<0.000000e+00> : vector<8x128xf32>
    %35 = vector.multi_reduction <add>, %34, %cst_4 [1] : vector<8x16x128xf32> to vector<8x128xf32>
    %36 = arith.addf %18, %35 : vector<8x128xf32>
    %c0_5 = arith.constant 0 : index
    %c0_6 = arith.constant 0 : index
    %37 = vector.load %arg10[%c0_5, %c0_6] : memref<8x128xf32, #tpu.memory_space<vmem>>, vector<8x128xf32>
    %38 = arith.addf %37, %36 : vector<8x128xf32>
    %c0_7 = arith.constant 0 : index
    %c0_8 = arith.constant 0 : index
    %39 = vector.load %arg10[%c0_7, %c0_8] : memref<8x128xf32, #tpu.memory_space<vmem>>, vector<8x128xf32>
    tpu.vector_store %arg10[%c0_7, %c0_8], %38 {strides = array<i32>} : memref<8x128xf32, #tpu.memory_space<vmem>>, vector<8x128xf32>,
    %c0_i32_9 = arith.constant 0 : i32
    %40 = arith.cmpi eq, %arg1, %c0_i32_9 : i32
    %41 = arith.extui %40 : i1 to i32
    %c0_i32_10 = arith.constant 0 : i32
    %42 = arith.cmpi ne, %41, %c0_i32_10 : i32
    scf.if %42 {
      %c0_11 = arith.constant 0 : index
      %c0_12 = arith.constant 0 : index
      %43 = vector.load %arg10[%c0_11, %c0_12] : memref<8x128xf32, #tpu.memory_space<vmem>>, vector<8x128xf32>
      %44 = vector.extract_strided_slice %43 {offsets = [0, 0], sizes = [8, 64], strides = [1, 1]} : vector<8x128xf32> to vector<8x64xf32>
      %45 = vector.extract_strided_slice %43 {offsets = [0, 64], sizes = [8, 64], strides = [1, 1]} : vector<8x128xf32> to vector<8x64xf32>
      %46 = arith.addf %44, %45 : vector<8x64xf32>
      %cst_13 = arith.constant dense<0.000000e+00> : vector<8xf32>
      %47 = vector.multi_reduction <add>, %46, %cst_13 [1] : vector<8x64xf32> to vector<8xf32>
      %48 = vector.shape_cast %47 : vector<8xf32> to vector<8x1xf32>
      %cst_14 = arith.constant 1.000000e+00 : f32
      %49 = vector.broadcast %cst_14 : f32 to vector<8x1xf32>
      %50 = arith.maximumf %48, %49 : vector<8x1xf32>
      %cst_15 = arith.constant 1.000000e+00 : f32
      %51 = vector.broadcast %cst_15 : f32 to vector<8x1xf32>
      %52 = arith.divf %51, %50 : vector<8x1xf32>
      %c0_16 = arith.constant 0 : index
      %c0_17 = arith.constant 0 : index
      %53 = vector.load %arg2[%c0_16, %c0_17] : memref<8x1xi32, #tpu.memory_space<vmem>>, vector<8x1xi32>
      %54 = tpu.iota {dimensions = array<i32: 1>} : vector<1x8xi32>
      %55 = vector.broadcast %53 : vector<8x1xi32> to vector<8x8xi32>
      %56 = vector.broadcast %54 : vector<1x8xi32> to vector<8x8xi32>
      %57 = arith.cmpi eq, %55, %56 : vector<8x8xi32>
      %58 = arith.extui %57 : vector<8x8xi1> to vector<8x8xi32>
      %59 = arith.sitofp %58 : vector<8x8xi32> to vector<8x8xf32>
      %c0_18 = arith.constant 0 : index
      %c0_19 = arith.constant 0 : index
      %60 = vector.load %arg4[%c0_18, %c0_19] : memref<8x32xf32, #tpu.memory_space<vmem>>, vector<8x32xf32>
      %cst_20 = arith.constant dense<0.000000e+00> : vector<8x32xf32>
      %61 = tpu.matmul %59, %60, %cst_20 {dimension_numbers = #tpu.dot_dimension_numbers<[1], [0], [0], [1], [0, 0, 1, 1], [], []>} : vector<8x8xf32>, vector<8x32xf32>, vector<8x32xf32> -> vector<8x32xf32>
      %c0_21 = arith.constant 0 : index
      %c0_22 = arith.constant 0 : index
      %62 = vector.load %arg5[%c0_21, %c0_22] : memref<64x32xf32, #tpu.memory_space<vmem>>, vector<64x32xf32>
      %cst_23 = arith.constant dense<0.000000e+00> : vector<8x32xf32>
      %63 = tpu.matmul %46, %62, %cst_23 {dimension_numbers = #tpu.dot_dimension_numbers<[1], [0], [0], [1], [0, 0, 1, 1], [], []>} : vector<8x64xf32>, vector<64x32xf32>, vector<8x32xf32> -> vector<8x32xf32>
      %64 = vector.broadcast %52 : vector<8x1xf32> to vector<8x32xf32>
      %65 = arith.mulf %63, %64 : vector<8x32xf32>
      %66 = arith.addf %61, %65 : vector<8x32xf32>
      %c0_24 = arith.constant 0 : index
      %c0_25 = arith.constant 0 : index
      %67 = vector.load %arg6[%c0_24, %c0_25] : memref<1x32xf32, #tpu.memory_space<vmem>>, vector<1x32xf32>
      %68 = vector.broadcast %67 : vector<1x32xf32> to vector<8x32xf32>
      %69 = arith.addf %66, %68 : vector<8x32xf32>
      %cst_26 = arith.constant 0.000000e+00 : f32
      %70 = vector.broadcast %cst_26 : f32 to vector<8x32xf32>
      %71 = arith.maximumf %69, %70 : vector<8x32xf32>
      %c0_27 = arith.constant 0 : index
      %c0_28 = arith.constant 0 : index
      %72 = vector.load %arg7[%c0_27, %c0_28] : memref<32x1xf32, #tpu.memory_space<vmem>>, vector<32x1xf32>
      %cst_29 = arith.constant dense<0.000000e+00> : vector<8x1xf32>
      %73 = tpu.matmul %71, %72, %cst_29 {dimension_numbers = #tpu.dot_dimension_numbers<[1], [0], [0], [1], [0, 0, 1, 1], [], []>} : vector<8x32xf32>, vector<32x1xf32>, vector<8x1xf32> -> vector<8x1xf32>
      %c0_30 = arith.constant 0 : index
      %c0_31 = arith.constant 0 : index
      %74 = vector.load %arg8[%c0_30, %c0_31] : memref<1x1xf32, #tpu.memory_space<vmem>>, vector<1x1xf32>
      %75 = vector.broadcast %74 : vector<1x1xf32> to vector<8x1xf32>
      %76 = arith.addf %73, %75 : vector<8x1xf32>
      %77 = arith.negf %76 : vector<8x1xf32>
      %78 = math.exp %77 : vector<8x1xf32>
      %cst_32 = arith.constant 1.000000e+00 : f32
      %79 = vector.broadcast %cst_32 : f32 to vector<8x1xf32>
      %80 = arith.addf %79, %78 : vector<8x1xf32>
      %81 = arith.divf %79, %80 : vector<8x1xf32>
      %c0_33 = arith.constant 0 : index
      %c0_34 = arith.constant 0 : index
      %82 = vector.load %arg9[%c0_33, %c0_34] : memref<8x1xf32, #tpu.memory_space<vmem>>, vector<8x1xf32>
      tpu.vector_store %arg9[%c0_33, %c0_34], %81 {strides = array<i32>} : memref<8x1xf32, #tpu.memory_space<vmem>>, vector<8x1xf32>,
    } else {
    }
    return
  }
  func.func @transform_0(%arg0: i32, %arg1: i32) -> (i32, i32) {
    %c0_i32 = arith.constant 0 : i32
    %c0_i32_0 = arith.constant 0 : i32
    return %arg0, %c0_i32 : i32, i32
  }
  func.func @transform_1(%arg0: i32, %arg1: i32) -> (i32, i32) {
    %c0_i32 = arith.constant 0 : i32
    return %arg0, %arg1 : i32, i32
  }
  func.func @transform_2(%arg0: i32, %arg1: i32) -> (i32, i32) {
    %c0_i32 = arith.constant 0 : i32
    %c0_i32_0 = arith.constant 0 : i32
    %c0_i32_1 = arith.constant 0 : i32
    return %c0_i32, %c0_i32_0 : i32, i32
  }
  func.func @transform_3(%arg0: i32, %arg1: i32) -> (i32, i32) {
    %c0_i32 = arith.constant 0 : i32
    %c0_i32_0 = arith.constant 0 : i32
    %c0_i32_1 = arith.constant 0 : i32
    return %c0_i32, %c0_i32_0 : i32, i32
  }
  func.func @transform_4(%arg0: i32, %arg1: i32) -> (i32, i32) {
    %c0_i32 = arith.constant 0 : i32
    %c0_i32_0 = arith.constant 0 : i32
    %c0_i32_1 = arith.constant 0 : i32
    return %c0_i32, %c0_i32_0 : i32, i32
  }
  func.func @transform_5(%arg0: i32, %arg1: i32) -> (i32, i32) {
    %c0_i32 = arith.constant 0 : i32
    %c0_i32_0 = arith.constant 0 : i32
    %c0_i32_1 = arith.constant 0 : i32
    return %c0_i32, %c0_i32_0 : i32, i32
  }
  func.func @transform_6(%arg0: i32, %arg1: i32) -> (i32, i32) {
    %c0_i32 = arith.constant 0 : i32
    %c0_i32_0 = arith.constant 0 : i32
    %c0_i32_1 = arith.constant 0 : i32
    return %c0_i32, %c0_i32_0 : i32, i32
  }
  func.func @transform_7(%arg0: i32, %arg1: i32) -> (i32, i32) {
    %c0_i32 = arith.constant 0 : i32
    %c0_i32_0 = arith.constant 0 : i32
    return %arg0, %c0_i32 : i32, i32
  }
}

</mosaic_0001>

<llo_original>
// kernel: model_baseline_forward.1
$region0: #{model_baseline_forward.1}
  #allocation0 [shape = 'u32[]', space=smem, size = 0x4, offset = 0x4, fixed_abs, tag = 'smem constant byte address 0x4 - core index']
  #allocation1 [shape = 'u32[144,128]{1,0:T(1,128)}', space=vmem, size = 0x12000, scoped, tag = 'internal scratch']
  #allocation2 [shape = 'f32[8,128]{1,0:T(8,128)}', space=vmem, size = 0x1000, scoped, tag = 'scratch operand']
  #allocation3 [shape = 'f32[1,1]{1,0:T(1,128)S(1)}', space=vmem, size = 0x200, scoped, tag = 'scoped memory for model_baseline_forward.1']
  %s0 = inlined_call_operand.vmem [shape: s32[8,1], index: 0, kind: input, shape index: {}]
  %s1 = inlined_call_operand.vmem [shape: s8[8,32], index: 1, kind: input, shape index: {}]
  %s2 = inlined_call_operand.vmem [shape: f32[8,32], index: 2, kind: input, shape index: {}]
  %s3 = inlined_call_operand.vmem [shape: f32[64,32], index: 3, kind: input, shape index: {}]
  %s4 = inlined_call_operand.vmem [shape: f32[1,32], index: 4, kind: input, shape index: {}]
  %s5 = inlined_call_operand.vmem [shape: f32[32,1], index: 5, kind: input, shape index: {}]
  %s6 = inlined_call_operand.<no memory space> [shape: f32[1,1], index: 6, kind: input, shape index: {}]
  %s7 = inlined_call_operand.vmem [shape: f32[8,1], index: 7, kind: output, shape index: {}]
  %s8 = sld [smem:[#allocation0]]
  $region46: #{model_baseline_forward.1} parent=0
    _
  %s10 = ssub.s32 1, %s8
  %s11 = scalar_select 0, %s10, %s8
  %v12 = vstv %s6
  %13 = vst [vmem:[#allocation3] sm:$0x1] %v12
  // Predicated region
  $region2: #{model_baseline_forward.1} parent=0 // pred_check
    _
  $region3: #{model_baseline_forward.1} parent=0 // pred_check_branch
    %15 = sbr.rel (0) target = $region5
  $region4: #{model_baseline_forward.1} parent=0 // pred_region
    _
  $region5: #{model_baseline_forward.1} parent=0 // pred_fallthru
    _
  // Predicated region
  $region6: #{model_baseline_forward.1} parent=0 // pred_check
    _
  $region7: #{model_baseline_forward.1} parent=0 // pred_check_branch
    %17 = sbr.rel (0) target = $region9
  $region8: #{model_baseline_forward.1} parent=0 // pred_region
    _
  $region9: #{model_baseline_forward.1} parent=0 // pred_fallthru
    _
  // Predicated region
  $region10: #{model_baseline_forward.1} parent=0 // pred_check
    _
  $region11: #{model_baseline_forward.1} parent=0 // pred_check_branch
    %19 = sbr.rel (0) target = $region13
  $region12: #{model_baseline_forward.1} parent=0 // pred_region
    _
  $region13: #{model_baseline_forward.1} parent=0 // pred_fallthru
    _
  // Predicated region
  $region14: #{model_baseline_forward.1} parent=0 // pred_check
    _
  $region15: #{model_baseline_forward.1} parent=0 // pred_check_branch
    %21 = sbr.rel (0) target = $region17
  $region16: #{model_baseline_forward.1} parent=0 // pred_region
    _
  $region17: #{model_baseline_forward.1} parent=0 // pred_fallthru
    _
  // Predicated region
  $region18: #{model_baseline_forward.1} parent=0 // pred_check
    _
  $region19: #{model_baseline_forward.1} parent=0 // pred_check_branch
    %23 = sbr.rel (0) target = $region21
  $region20: #{model_baseline_forward.1} parent=0 // pred_region
    _
  $region21: #{model_baseline_forward.1} parent=0 // pred_fallthru
    _
  // Predicated region
  $region22: #{model_baseline_forward.1} parent=0 // pred_check
    _
  $region23: #{model_baseline_forward.1} parent=0 // pred_check_branch
    %25 = sbr.rel (0) target = $region25
  $region24: #{model_baseline_forward.1} parent=0 // pred_region
    _
  $region25: #{model_baseline_forward.1} parent=0 // pred_fallthru
    _
  // Predicated region
  $region26: #{model_baseline_forward.1} parent=0 // pred_check
    _
  $region27: #{model_baseline_forward.1} parent=0 // pred_check_branch
    %27 = sbr.rel (0) target = $region29
  $region28: #{model_baseline_forward.1} parent=0 // pred_region
    _
  $region29: #{model_baseline_forward.1} parent=0 // pred_fallthru
    _
  %p28 = scmp.eq.s32.totalorder 0, 0
  // Predicated region
  $region30: #{model_baseline_forward.1} parent=0 // pred_check
    %p29 = pneg %p28
  $region31: #{model_baseline_forward.1} parent=0 // pred_check_branch
    %31 = sbr.rel (%p29) target = $region33
  $region32: #{model_baseline_forward.1} parent=0 // pred_region
    %32 = vst [vmem:[#allocation2] sm:$0xff] 0.0
  $region33: #{model_baseline_forward.1} parent=0 // pred_fallthru
    _
  %v33 = vlaneseq
  %v34 = vand.u32 %v33, 127
  %vm35 = vcmp.lt.s32.totalorder %v34, 64
  %v36 = vadd.s32 %v34, 1
  %v37 = vsel %vm35, %v36, 4294967295
  %v38 = vcvt.s32.f32 %v37
  %vm39 = vcmp.ge.s32.totalorder %v34, 64
  %v40 = vsub.s32 %v34, 63
  %v41 = vsel %vm39, %v40, 4294967295
  %v42 = vcvt.s32.f32 %v41
  %v43 = vld [vmem:[%s1] sm:$0x3]
  %v44 = vunpack.c.0.s8 %v43
  %v45 = vcvt.s32.f32 %v44
  %v46 = vlaneseq
  %v47 = vshrl.u32 %v46, 7
  %v48 = vsub.s32 0, %v47
  %v49 = vrot.slane %v45, %v48
  %51 = vbcast.lane.b32.xlu0 %v49, 256
  %v52 = vpop.permute.xlu0 %51
  %s54 = sor.u32 256, 8
  %55 = vbcast.lane.b32.xlu0 %v49, %s54
  %v56 = vpop.permute.xlu0 %55
  %v57 = vlaneseq
  %v58 = vshrl.u32 %v57, 7
  %v59 = vsub.s32 1, %v58
  %v60 = vrot.slane %v45, %v59
  %62 = vbcast.lane.b32.xlu0 %v60, 256
  %v63 = vpop.permute.xlu0 %62
  %s65 = sor.u32 256, 8
  %66 = vbcast.lane.b32.xlu0 %v60, %s65
  %v67 = vpop.permute.xlu0 %66
  %v68 = vlaneseq
  %v69 = vshrl.u32 %v68, 7
  %v70 = vsub.s32 2, %v69
  %v71 = vrot.slane %v45, %v70
  %73 = vbcast.lane.b32.xlu0 %v71, 256
  %v74 = vpop.permute.xlu0 %73
  %s76 = sor.u32 256, 8
  %77 = vbcast.lane.b32.xlu0 %v71, %s76
  %v78 = vpop.permute.xlu0 %77
  %v79 = vlaneseq
  %v80 = vshrl.u32 %v79, 7
  %v81 = vsub.s32 3, %v80
  %v82 = vrot.slane %v45, %v81
  %84 = vbcast.lane.b32.xlu0 %v82, 256
  %v85 = vpop.permute.xlu0 %84
  %s87 = sor.u32 256, 8
  %88 = vbcast.lane.b32.xlu0 %v82, %s87
  %v89 = vpop.permute.xlu0 %88
  %v90 = vlaneseq
  %v91 = vshrl.u32 %v90, 7
  %v92 = vsub.s32 4, %v91
  %v93 = vrot.slane %v45, %v92
  %95 = vbcast.lane.b32.xlu0 %v93, 256
  %v96 = vpop.permute.xlu0 %95
  %s98 = sor.u32 256, 8
  %99 = vbcast.lane.b32.xlu0 %v93, %s98
  %v100 = vpop.permute.xlu0 %99
  %v101 = vlaneseq
  %v102 = vshrl.u32 %v101, 7
  %v103 = vsub.s32 5, %v102
  %v104 = vrot.slane %v45, %v103
  %106 = vbcast.lane.b32.xlu0 %v104, 256
  %v107 = vpop.permute.xlu0 %106
  %s109 = sor.u32 256, 8
  %110 = vbcast.lane.b32.xlu0 %v104, %s109
  %v111 = vpop.permute.xlu0 %110
  %v112 = vlaneseq
  %v113 = vshrl.u32 %v112, 7
  %v114 = vsub.s32 6, %v113
  %v115 = vrot.slane %v45, %v114
  %117 = vbcast.lane.b32.xlu0 %v115, 256
  %v118 = vpop.permute.xlu0 %117
  %s120 = sor.u32 256, 8
  %121 = vbcast.lane.b32.xlu0 %v115, %s120
  %v122 = vpop.permute.xlu0 %121
  %v123 = vlaneseq
  %v124 = vshrl.u32 %v123, 7
  %v125 = vsub.s32 7, %v124
  %v126 = vrot.slane %v45, %v125
  %128 = vbcast.lane.b32.xlu0 %v126, 256
  %v129 = vpop.permute.xlu0 %128
  %s131 = sor.u32 256, 8
  %132 = vbcast.lane.b32.xlu0 %v126, %s131
  %v133 = vpop.permute.xlu0 %132
  %s135 = sor.u32 256, 16
  %136 = vbcast.lane.b32.xlu0 %v49, %s135
  %v137 = vpop.permute.xlu0 %136
  %s139 = sor.u32 256, 24
  %140 = vbcast.lane.b32.xlu0 %v49, %s139
  %v141 = vpop.permute.xlu0 %140
  %s143 = sor.u32 256, 16
  %144 = vbcast.lane.b32.xlu0 %v60, %s143
  %v145 = vpop.permute.xlu0 %144
  %s147 = sor.u32 256, 24
  %148 = vbcast.lane.b32.xlu0 %v60, %s147
  %v149 = vpop.permute.xlu0 %148
  %s151 = sor.u32 256, 16
  %152 = vbcast.lane.b32.xlu0 %v71, %s151
  %v153 = vpop.permute.xlu0 %152
  %s155 = sor.u32 256, 24
  %156 = vbcast.lane.b32.xlu0 %v71, %s155
  %v157 = vpop.permute.xlu0 %156
  %s159 = sor.u32 256, 16
  %160 = vbcast.lane.b32.xlu0 %v82, %s159
  %v161 = vpop.permute.xlu0 %160
  %s163 = sor.u32 256, 24
  %164 = vbcast.lane.b32.xlu0 %v82, %s163
  %v165 = vpop.permute.xlu0 %164
  %s167 = sor.u32 256, 16
  %168 = vbcast.lane.b32.xlu0 %v93, %s167
  %v169 = vpop.permute.xlu0 %168
  %s171 = sor.u32 256, 24
  %172 = vbcast.lane.b32.xlu0 %v93, %s171
  %v173 = vpop.permute.xlu0 %172
  %s175 = sor.u32 256, 16
  %176 = vbcast.lane.b32.xlu0 %v104, %s175
  %v177 = vpop.permute.xlu0 %176
  %s179 = sor.u32 256, 24
  %180 = vbcast.lane.b32.xlu0 %v104, %s179
  %v181 = vpop.permute.xlu0 %180
  %s183 = sor.u32 256, 16
  %184 = vbcast.lane.b32.xlu0 %v115, %s183
  %v185 = vpop.permute.xlu0 %184
  %s187 = sor.u32 256, 24
  %188 = vbcast.lane.b32.xlu0 %v115, %s187
  %v189 = vpop.permute.xlu0 %188
  %s191 = sor.u32 256, 16
  %192 = vbcast.lane.b32.xlu0 %v126, %s191
  %v193 = vpop.permute.xlu0 %192
  %s195 = sor.u32 256, 24
  %196 = vbcast.lane.b32.xlu0 %v126, %s195
  %v197 = vpop.permute.xlu0 %196
  %vm198 = vcmp.eq.f32.partialorder %v52, %v38
  %vm199 = vcmp.eq.f32.partialorder %v56, %v38
  %vm200 = vcmp.eq.f32.partialorder %v63, %v38
  %vm201 = vcmp.eq.f32.partialorder %v67, %v38
  %vm202 = vcmp.eq.f32.partialorder %v74, %v38
  %vm203 = vcmp.eq.f32.partialorder %v78, %v38
  %vm204 = vcmp.eq.f32.partialorder %v85, %v38
  %vm205 = vcmp.eq.f32.partialorder %v89, %v38
  %vm206 = vcmp.eq.f32.partialorder %v96, %v38
  %vm207 = vcmp.eq.f32.partialorder %v100, %v38
  %vm208 = vcmp.eq.f32.partialorder %v107, %v38
  %vm209 = vcmp.eq.f32.partialorder %v111, %v38
  %vm210 = vcmp.eq.f32.partialorder %v118, %v38
  %vm211 = vcmp.eq.f32.partialorder %v122, %v38
  %vm212 = vcmp.eq.f32.partialorder %v129, %v38
  %vm213 = vcmp.eq.f32.partialorder %v133, %v38
  %vm214 = vcmp.eq.f32.partialorder %v137, %v42
  %vm215 = vcmp.eq.f32.partialorder %v141, %v42
  %vm216 = vcmp.eq.f32.partialorder %v145, %v42
  %vm217 = vcmp.eq.f32.partialorder %v149, %v42
  %vm218 = vcmp.eq.f32.partialorder %v153, %v42
  %vm219 = vcmp.eq.f32.partialorder %v157, %v42
  %vm220 = vcmp.eq.f32.partialorder %v161, %v42
  %vm221 = vcmp.eq.f32.partialorder %v165, %v42
  %vm222 = vcmp.eq.f32.partialorder %v169, %v42
  %vm223 = vcmp.eq.f32.partialorder %v173, %v42
  %vm224 = vcmp.eq.f32.partialorder %v177, %v42
  %vm225 = vcmp.eq.f32.partialorder %v181, %v42
  %vm226 = vcmp.eq.f32.partialorder %v185, %v42
  %vm227 = vcmp.eq.f32.partialorder %v189, %v42
  %vm228 = vcmp.eq.f32.partialorder %v193, %v42
  %vm229 = vcmp.eq.f32.partialorder %v197, %v42
  %vm230 = vmor %vm198, %vm214
  %vm231 = vmor %vm199, %vm215
  %vm232 = vmor %vm200, %vm216
  %vm233 = vmor %vm201, %vm217
  %vm234 = vmor %vm202, %vm218
  %vm235 = vmor %vm203, %vm219
  %vm236 = vmor %vm204, %vm220
  %vm237 = vmor %vm205, %vm221
  %vm238 = vmor %vm206, %vm222
  %vm239 = vmor %vm207, %vm223
  %vm240 = vmor %vm208, %vm224
  %vm241 = vmor %vm209, %vm225
  %vm242 = vmor %vm210, %vm226
  %vm243 = vmor %vm211, %vm227
  %vm244 = vmor %vm212, %vm228
  %vm245 = vmor %vm213, %vm229
  %v246 = vsel %vm230, 1, 0
  %v247 = vsel %vm231, 1, 0
  %v248 = vsel %vm232, 1, 0
  %v249 = vsel %vm233, 1, 0
  %v250 = vsel %vm234, 1, 0
  %v251 = vsel %vm235, 1, 0
  %v252 = vsel %vm236, 1, 0
  %v253 = vsel %vm237, 1, 0
  %v254 = vsel %vm238, 1, 0
  %v255 = vsel %vm239, 1, 0
  %v256 = vsel %vm240, 1, 0
  %v257 = vsel %vm241, 1, 0
  %v258 = vsel %vm242, 1, 0
  %v259 = vsel %vm243, 1, 0
  %v260 = vsel %vm244, 1, 0
  %v261 = vsel %vm245, 1, 0
  %v262 = vcvt.s32.f32 %v246
  %v263 = vcvt.s32.f32 %v247
  %v264 = vcvt.s32.f32 %v248
  %v265 = vcvt.s32.f32 %v249
  %v266 = vcvt.s32.f32 %v250
  %v267 = vcvt.s32.f32 %v251
  %v268 = vcvt.s32.f32 %v252
  %v269 = vcvt.s32.f32 %v253
  %v270 = vcvt.s32.f32 %v254
  %v271 = vcvt.s32.f32 %v255
  %v272 = vcvt.s32.f32 %v256
  %v273 = vcvt.s32.f32 %v257
  %v274 = vcvt.s32.f32 %v258
  %v275 = vcvt.s32.f32 %v259
  %v276 = vcvt.s32.f32 %v260
  %v277 = vcvt.s32.f32 %v261
  %v278 = vadd.f32 %v262, %v263
  %v279 = vrot.slane %v278, 4
  %v280 = vadd.f32 %v278, %v279
  %v281 = vrot.slane %v280, 2
  %v282 = vadd.f32 %v280, %v281
  %v283 = vrot.slane %v282, 1
  %v284 = vadd.f32 %v282, %v283
  %v285 = vadd.f32 %v264, %v265
  %v286 = vrot.slane %v285, 4
  %v287 = vadd.f32 %v285, %v286
  %v288 = vrot.slane %v287, 2
  %v289 = vadd.f32 %v287, %v288
  %v290 = vrot.slane %v289, 1
  %v291 = vadd.f32 %v289, %v290
  %v292 = vadd.f32 %v266, %v267
  %v293 = vrot.slane %v292, 4
  %v294 = vadd.f32 %v292, %v293
  %v295 = vrot.slane %v294, 2
  %v296 = vadd.f32 %v294, %v295
  %v297 = vrot.slane %v296, 1
  %v298 = vadd.f32 %v296, %v297
  %v299 = vadd.f32 %v268, %v269
  %v300 = vrot.slane %v299, 4
  %v301 = vadd.f32 %v299, %v300
  %v302 = vrot.slane %v301, 2
  %v303 = vadd.f32 %v301, %v302
  %v304 = vrot.slane %v303, 1
  %v305 = vadd.f32 %v303, %v304
  %v306 = vadd.f32 %v270, %v271
  %v307 = vrot.slane %v306, 4
  %v308 = vadd.f32 %v306, %v307
  %v309 = vrot.slane %v308, 2
  %v310 = vadd.f32 %v308, %v309
  %v311 = vrot.slane %v310, 1
  %v312 = vadd.f32 %v310, %v311
  %v313 = vadd.f32 %v272, %v273
  %v314 = vrot.slane %v313, 4
  %v315 = vadd.f32 %v313, %v314
  %v316 = vrot.slane %v315, 2
  %v317 = vadd.f32 %v315, %v316
  %v318 = vrot.slane %v317, 1
  %v319 = vadd.f32 %v317, %v318
  %v320 = vadd.f32 %v274, %v275
  %v321 = vrot.slane %v320, 4
  %v322 = vadd.f32 %v320, %v321
  %v323 = vrot.slane %v322, 2
  %v324 = vadd.f32 %v322, %v323
  %v325 = vrot.slane %v324, 1
  %v326 = vadd.f32 %v324, %v325
  %v327 = vadd.f32 %v276, %v277
  %v328 = vrot.slane %v327, 4
  %v329 = vadd.f32 %v327, %v328
  %v330 = vrot.slane %v329, 2
  %v331 = vadd.f32 %v329, %v330
  %v332 = vrot.slane %v331, 1
  %v333 = vadd.f32 %v331, %v332
  %v334 = vadd.f32 %v284, 0.0
  %v335 = vadd.f32 %v291, 0.0
  %v336 = vadd.f32 %v298, 0.0
  %v337 = vadd.f32 %v305, 0.0
  %v338 = vadd.f32 %v312, 0.0
  %v339 = vadd.f32 %v319, 0.0
  %v340 = vadd.f32 %v326, 0.0
  %v341 = vadd.f32 %v333, 0.0
  %v342 = vld [vmem:[#allocation2] sm:$0xff]
  %vm351 = vcmask 1041409
  %v352 = vsel %vm351, %v335, %v334
  %vm353 = vcmask 1042434
  %v354 = vsel %vm353, %v336, %v352
  %vm355 = vcmask 1043459
  %v356 = vsel %vm355, %v337, %v354
  %vm357 = vcmask 1044484
  %v358 = vsel %vm357, %v338, %v356
  %vm359 = vcmask 1045509
  %v360 = vsel %vm359, %v339, %v358
  %vm361 = vcmask 1046534
  %v362 = vsel %vm361, %v340, %v360
  %vm363 = vcmask 1047559
  %v364 = vsel %vm363, %v341, %v362
  %v366 = vadd.f32 %v342, %v364
  %367 = vst [vmem:[#allocation2] sm:$0xff] %v366
  // Predicated region
  $region34: #{model_baseline_forward.1} parent=0 // pred_check
    %p368 = pneg %p28
  $region35: #{model_baseline_forward.1} parent=0 // pred_check_branch
    %370 = sbr.rel (%p368) target = $region37
  $region36: #{model_baseline_forward.1} parent=0 // pred_region
    %v371 = vld [vmem:[#allocation2] sm:$0xff]
    %373 = vrot.lane.b32.xlu0 %v371, 64
    %v374 = vpop.permute.xlu0 %373
    %v376 = vadd.f32 %v371, %v374
    %vm377 = vcmask 523264
    %v378 = vsel %vm377, %v376, 0.0
    %379 = vadd.xlane.f32.xlu0 %v378
    %v380 = vpop.xlane.xlu0 %379
    %v381 = vmax.f32 %v380, 1.0
    %v382 = vrcp.pop %v381
    %v383 = vmul.f32 1.0, %v382
    %v384 = vld [vmem:[%s0] sm:$0xff]
    %385 = vset.pattern.permute.xlu0 0
    %386 = vperm.xlu0 %385, %v384
    %v387 = vpop.permute.xlu0 %386
    %vm388 = vcmp.eq.s32.totalorder %v387, %v34
    %v389 = vsel %vm388, 1, 0
    %v390 = vcvt.s32.f32 %v389
    %v391 = vld [vmem:[%s2] sm:$0xff]
    %v392 = vld [vmem:[%s3] sm:$0xff]
    %v393 = vld [vmem:[%s3 + $0x8] sm:$0xff]
    %v394 = vld [vmem:[%s3 + $0x10] sm:$0xff]
    %v395 = vld [vmem:[%s3 + $0x18] sm:$0xff]
    %v396 = vld [vmem:[%s3 + $0x20] sm:$0xff]
    %v397 = vld [vmem:[%s3 + $0x28] sm:$0xff]
    %v398 = vld [vmem:[%s3 + $0x30] sm:$0xff]
    %v399 = vld [vmem:[%s3 + $0x38] sm:$0xff]
    %v401 = vsel %vm377, %v376, 0
    %403 = vmatprep.subr.mxu0 0.0
    %404 = vmatpush1.msra.mxu0 %v392
    %405 = vmatprep.subr.mxu0 0.0
    %406 = vmatpush1.msra.mxu0 %v393
    %407 = vmatprep.subr.mxu0 0.0
    %408 = vmatpush1.msra.mxu0 %v394
    %409 = vmatprep.subr.mxu0 0.0
    %410 = vmatpush1.msra.mxu0 %v395
    %411 = vmatprep.subr.mxu0 0.0
    %412 = vmatpush1.msra.mxu0 %v396
    %413 = vmatprep.subr.mxu0 0.0
    %414 = vmatpush1.msra.mxu0 %v397
    %415 = vmatprep.subr.mxu0 0.0
    %416 = vmatpush1.msra.mxu0 %v398
    %417 = vmatprep.subr.mxu0 0.0
    %418 = vmatpush1.msra.mxu0 %v399
    %419 = vmatprep.subr.mxu0 0.0
    %420 = vmatpush1.msra.mxu0 0.0
    %421 = vmatprep.subr.mxu0 0.0
    %422 = vmatpush1.msra.mxu0 0.0
    %423 = vmatprep.subr.mxu0 0.0
    %424 = vmatpush1.msra.mxu0 0.0
    %425 = vmatprep.subr.mxu0 0.0
    %426 = vmatpush1.msra.mxu0 0.0
    %427 = vmatprep.subr.mxu0 0.0
    %428 = vmatpush1.msra.mxu0 0.0
    %429 = vmatprep.subr.mxu0 0.0
    %430 = vmatpush1.msra.mxu0 0.0
    %431 = vmatprep.subr.mxu0 0.0
    %432 = vmatpush1.msra.mxu0 0.0
    %433 = vmatprep.subr.mxu0 0.0
    %434 = vmatpush1.msra.mxu0 0.0
    %435 = vmatprep.subr.mxu0 0.0
    %436 = vmatpush1.msra.mxu0 0.0
    %437 = vmatprep.subr.mxu0 0.0
    %438 = vmatpush1.msra.mxu0 0.0
    %439 = vmatprep.subr.mxu0 0.0
    %440 = vmatpush1.msra.mxu0 0.0
    %441 = vmatprep.subr.mxu0 0.0
    %442 = vmatpush1.msra.mxu0 0.0
    %443 = vmatprep.subr.mxu0 0.0
    %444 = vmatpush1.msra.mxu0 0.0
    %445 = vmatprep.subr.mxu0 0.0
    %446 = vmatpush1.msra.mxu0 0.0
    %447 = vmatprep.subr.mxu0 0.0
    %448 = vmatpush1.msra.mxu0 0.0
    %449 = vmatprep.subr.mxu0 0.0
    %450 = vmatpush1.msra.mxu0 0.0
    %451 = vmatprep.subr.mxu0 0.0
    %452 = vmatpush1.msra.mxu0 0.0
    %453 = vmatprep.subr.mxu0 0.0
    %454 = vmatpush1.msra.mxu0 0.0
    %455 = vmatprep.subr.mxu0 0.0
    %456 = vmatpush1.msra.mxu0 0.0
    %457 = vmatprep.subr.mxu0 0.0
    %458 = vmatpush1.msra.mxu0 0.0
    %459 = vmatprep.subr.mxu0 0.0
    %460 = vmatpush1.msra.mxu0 0.0
    %461 = vmatprep.subr.mxu0 0.0
    %462 = vmatpush1.msra.mxu0 0.0
    %463 = vmatprep.subr.mxu0 0.0
    %464 = vmatpush1.msra.mxu0 0.0
    %465 = vmatprep.subr.mxu0 0.0
    %466 = vmatpush1.msra.mxu0 0.0
    %467 = vmatprep.mubr.f32.mxu0 0.0
    %468 = vmatmul.mubr.f32.gmra.mrb[0].mxu0 %v401
    %v469 = vpop.f32.mrb[0].mxu0
    %v470 = vadd.f32 0.0, %v469
    %v471 = vpop.f32.mrb[0].mxu0
    %472 = vdwg.mxu0
    %v473 = vmul.f32 %v470, %v383
    %vm474 = vcmask 64512
    %v476 = vsel %vm474, %v390, 0
    %478 = vmatprep.subr.mxu0 0.0
    %479 = vmatpush1.msra.mxu0 %v391
    %480 = vmatprep.subr.mxu0 0.0
    %481 = vmatpush1.msra.mxu0 0.0
    %482 = vmatprep.subr.mxu0 0.0
    %483 = vmatpush1.msra.mxu0 0.0
    %484 = vmatprep.subr.mxu0 0.0
    %485 = vmatpush1.msra.mxu0 0.0
    %486 = vmatprep.subr.mxu0 0.0
    %487 = vmatpush1.msra.mxu0 0.0
    %488 = vmatprep.subr.mxu0 0.0
    %489 = vmatpush1.msra.mxu0 0.0
    %490 = vmatprep.subr.mxu0 0.0
    %491 = vmatpush1.msra.mxu0 0.0
    %492 = vmatprep.subr.mxu0 0.0
    %493 = vmatpush1.msra.mxu0 0.0
    %494 = vmatprep.subr.mxu0 0.0
    %495 = vmatpush1.msra.mxu0 0.0
    %496 = vmatprep.subr.mxu0 0.0
    %497 = vmatpush1.msra.mxu0 0.0
    %498 = vmatprep.subr.mxu0 0.0
    %499 = vmatpush1.msra.mxu0 0.0
    %500 = vmatprep.subr.mxu0 0.0
    %501 = vmatpush1.msra.mxu0 0.0
    %502 = vmatprep.subr.mxu0 0.0
    %503 = vmatpush1.msra.mxu0 0.0
    %504 = vmatprep.subr.mxu0 0.0
    %505 = vmatpush1.msra.mxu0 0.0
    %506 = vmatprep.subr.mxu0 0.0
    %507 = vmatpush1.msra.mxu0 0.0
    %508 = vmatprep.subr.mxu0 0.0
    %509 = vmatpush1.msra.mxu0 0.0
    %510 = vmatprep.subr.mxu0 0.0
    %511 = vmatpush1.msra.mxu0 0.0
    %512 = vmatprep.subr.mxu0 0.0
    %513 = vmatpush1.msra.mxu0 0.0
    %514 = vmatprep.subr.mxu0 0.0
    %515 = vmatpush1.msra.mxu0 0.0
    %516 = vmatprep.subr.mxu0 0.0
    %517 = vmatpush1.msra.mxu0 0.0
    %518 = vmatprep.subr.mxu0 0.0
    %519 = vmatpush1.msra.mxu0 0.0
    %520 = vmatprep.subr.mxu0 0.0
    %521 = vmatpush1.msra.mxu0 0.0
    %522 = vmatprep.subr.mxu0 0.0
    %523 = vmatpush1.msra.mxu0 0.0
    %524 = vmatprep.subr.mxu0 0.0
    %525 = vmatpush1.msra.mxu0 0.0
    %526 = vmatprep.subr.mxu0 0.0
    %527 = vmatpush1.msra.mxu0 0.0
    %528 = vmatprep.subr.mxu0 0.0
    %529 = vmatpush1.msra.mxu0 0.0
    %530 = vmatprep.subr.mxu0 0.0
    %531 = vmatpush1.msra.mxu0 0.0
    %532 = vmatprep.subr.mxu0 0.0
    %533 = vmatpush1.msra.mxu0 0.0
    %534 = vmatprep.subr.mxu0 0.0
    %535 = vmatpush1.msra.mxu0 0.0
    %536 = vmatprep.subr.mxu0 0.0
    %537 = vmatpush1.msra.mxu0 0.0
    %538 = vmatprep.subr.mxu0 0.0
    %539 = vmatpush1.msra.mxu0 0.0
    %540 = vmatprep.subr.mxu0 0.0
    %541 = vmatpush1.msra.mxu0 0.0
    %542 = vmatprep.mubr.f32.mxu0 0.0
    %543 = vmatmul.mubr.f32.gmra.mrb[0].mxu0 %v476
    %v544 = vpop.f32.mrb[0].mxu0
    %v545 = vadd.f32 %v473, %v544
    %v546 = vpop.f32.mrb[0].mxu0
    %547 = vdwg.mxu0
    %v548 = vld [vmem:[%s4] sm:$0x1]
    %v550 = vlaneseq
    %v551 = vshrl.u32 %v550, 7
    %v552 = vsub.s32 0, %v551
    %v553 = vrot.slane %v548, %v552
    %v555 = vadd.f32 %v545, %v553
    %v556 = vmax.f32 %v555, 0.0
    %v557 = vld [vmem:[%s5] sm:$0xff]
    %v558 = vld [vmem:[%s5 + $0x8] sm:$0xff]
    %v559 = vld [vmem:[%s5 + $0x10] sm:$0xff]
    %v560 = vld [vmem:[%s5 + $0x18] sm:$0xff]
    %v561 = vld [vmem:[#allocation3] sm:$0x1]
    %v563 = vlaneseq
    %v564 = vshrl.u32 %v563, 7
    %v565 = vsub.s32 0, %v564
    %v566 = vrot.slane %v561, %v565
    %vm568 = vcmask 261120
    %v570 = vsel %vm568, %v556, 0
    %572 = vmatprep.subr.mxu0 0.0
    %573 = vmatpush1.msra.mxu0 %v557
    %574 = vmatprep.subr.mxu0 0.0
    %575 = vmatpush1.msra.mxu0 %v558
    %576 = vmatprep.subr.mxu0 0.0
    %577 = vmatpush1.msra.mxu0 %v559
    %578 = vmatprep.subr.mxu0 0.0
    %579 = vmatpush1.msra.mxu0 %v560
    %580 = vmatprep.subr.mxu0 0.0
    %581 = vmatpush1.msra.mxu0 0.0
    %582 = vmatprep.subr.mxu0 0.0
    %583 = vmatpush1.msra.mxu0 0.0
    %584 = vmatprep.subr.mxu0 0.0
    %585 = vmatpush1.msra.mxu0 0.0
    %586 = vmatprep.subr.mxu0 0.0
    %587 = vmatpush1.msra.mxu0 0.0
    %588 = vmatprep.subr.mxu0 0.0
    %589 = vmatpush1.msra.mxu0 0.0
    %590 = vmatprep.subr.mxu0 0.0
    %591 = vmatpush1.msra.mxu0 0.0
    %592 = vmatprep.subr.mxu0 0.0
    %593 = vmatpush1.msra.mxu0 0.0
    %594 = vmatprep.subr.mxu0 0.0
    %595 = vmatpush1.msra.mxu0 0.0
    %596 = vmatprep.subr.mxu0 0.0
    %597 = vmatpush1.msra.mxu0 0.0
    %598 = vmatprep.subr.mxu0 0.0
    %599 = vmatpush1.msra.mxu0 0.0
    %600 = vmatprep.subr.mxu0 0.0
    %601 = vmatpush1.msra.mxu0 0.0
    %602 = vmatprep.subr.mxu0 0.0
    %603 = vmatpush1.msra.mxu0 0.0
    %604 = vmatprep.subr.mxu0 0.0
    %605 = vmatpush1.msra.mxu0 0.0
    %606 = vmatprep.subr.mxu0 0.0
    %607 = vmatpush1.msra.mxu0 0.0
    %608 = vmatprep.subr.mxu0 0.0
    %609 = vmatpush1.msra.mxu0 0.0
    %610 = vmatprep.subr.mxu0 0.0
    %611 = vmatpush1.msra.mxu0 0.0
    %612 = vmatprep.subr.mxu0 0.0
    %613 = vmatpush1.msra.mxu0 0.0
    %614 = vmatprep.subr.mxu0 0.0
    %615 = vmatpush1.msra.mxu0 0.0
    %616 = vmatprep.subr.mxu0 0.0
    %617 = vmatpush1.msra.mxu0 0.0
    %618 = vmatprep.subr.mxu0 0.0
    %619 = vmatpush1.msra.mxu0 0.0
    %620 = vmatprep.subr.mxu0 0.0
    %621 = vmatpush1.msra.mxu0 0.0
    %622 = vmatprep.subr.mxu0 0.0
    %623 = vmatpush1.msra.mxu0 0.0
    %624 = vmatprep.subr.mxu0 0.0
    %625 = vmatpush1.msra.mxu0 0.0
    %626 = vmatprep.subr.mxu0 0.0
    %627 = vmatpush1.msra.mxu0 0.0
    %628 = vmatprep.subr.mxu0 0.0
    %629 = vmatpush1.msra.mxu0 0.0
    %630 = vmatprep.subr.mxu0 0.0
    %631 = vmatpush1.msra.mxu0 0.0
    %632 = vmatprep.subr.mxu0 0.0
    %633 = vmatpush1.msra.mxu0 0.0
    %634 = vmatprep.subr.mxu0 0.0
    %635 = vmatpush1.msra.mxu0 0.0
    %636 = vmatprep.mubr.f32.mxu0 0.0
    %637 = vmatmul.mubr.f32.gmra.mrb[0].mxu0 %v570
    %v638 = vpop.f32.mrb[0].mxu0
    %v639 = vadd.f32 %v566, %v638
    %v640 = vpop.f32.mrb[0].mxu0
    %641 = vdwg.mxu0
    %v642 = vxor.u32 %v639, 2147483648
    %v643 = vmul.f32 %v642, 1.442695
    %v644 = vpow.pop %v643
    %v645 = vadd.f32 %v644, 1.0
    %v646 = vrcp.pop %v645
    %v647 = vmul.f32 1.0, %v646
    %vm648 = vcmask 7168
    %649 = vst.msk [vmem:[%s7] sm:$0xff] %vm648, %v647
  $region37: #{model_baseline_forward.1} parent=0 // pred_fallthru
    _
  // Predicated region
  $region38: #{model_baseline_forward.1} parent=0 // pred_check
    _
  $region39: #{model_baseline_forward.1} parent=0 // pred_check_branch
    %651 = sbr.rel (0) target = $region41
  $region40: #{model_baseline_forward.1} parent=0 // pred_region
    _
  $region41: #{model_baseline_forward.1} parent=0 // pred_fallthru
    _
  // Predicated region
  $region42: #{model_baseline_forward.1} parent=0 // pred_check
    _
  $region43: #{model_baseline_forward.1} parent=0 // pred_check_branch
    %653 = sbr.rel (0) target = $region45
  $region44: #{model_baseline_forward.1} parent=0 // pred_region
    _
  $region45: #{model_baseline_forward.1} parent=0 // pred_fallthru
    _

</llo_original>
